<compile_context>
chip_gen: v6e
topology: v6e:2x2x1
jax: 0.10.0
libtpu: 0.0.40
codegen_flags: <defaults>
</compile_context>

<pallas_src>
import jax
import jax.numpy as jnp
import numpy as np
from jax.experimental import pallas as pl
from jax.experimental.pallas import tpu as pltpu


def _cdiv(a, b):
    return -(-a // b)


def _round_up(x, m):
    return _cdiv(x, m) * m


def _num_tensorcores():
    """Best-effort TensorCores-per-chip (v7x: 2). Falls back to 1 (v5e/v6e)."""
    try:
        info = pltpu.get_tpu_info()
        for attr in ("num_cores", "num_tensorcores", "tensorcore_count"):
            v = getattr(info, attr, None)
            if v:
                return int(v)
    except Exception:
        pass
    try:
        dev = jax.devices()[0]
        for attr in ("num_cores", "core_count"):
            v = getattr(dev, attr, None)
            if v:
                return int(v)
    except Exception:
        pass
    return 1


def _speaker_embedding_kernel(ids_ref, table_ref, out_ref):
    # ids_ref:   (rows_tile, pack)      int32  -- pack token ids per output row,
    #                                             pre-offset by p*num_embeddings.
    # table_ref: (K_pad, lane_out)      table dtype -- block-diagonal packed table.
    # out_ref:   (rows_tile, lane_out)  table dtype -- lane-dense packed output.
    ids = ids_ref[...]
    table = table_ref[...]
    rows, pack = ids.shape
    k_pad, _ = table.shape

    # One shared lane-dense iota; the pack columns hit disjoint K ranges, so OR
    # of the compares yields a single one-hot with `pack` ones per row.
    iota = jax.lax.broadcasted_iota(jnp.int32, (rows, k_pad), 1)
    hits = ids[:, 0:1] == iota
    for p in range(1, pack):                       # static unroll, pack <= 16
        hits = hits | (ids[:, p:p + 1] == iota)
    onehot = hits.astype(table.dtype)

    # Single dense MXU tile + single unmasked full-width store.
    out_ref[...] = jnp.dot(
        onehot, table, preferred_element_type=jnp.float32
    ).astype(out_ref.dtype)


def bart_learned_speaker_embedding(
    speaker_type_ids,
    embedding_table,
    *,
    tok_tile=None,
    min_tokens_for_kernel=2048,
):
    """speaker_type_ids: int array, any shape. embedding_table: (V, D) float.
    Returns speaker_type_ids.shape + (D,) in the table's dtype."""
    speaker_type_ids = jnp.asarray(speaker_type_ids)
    embedding_table = jnp.asarray(embedding_table)

    id_shape = speaker_type_ids.shape
    n_tokens = int(np.prod(id_shape)) if id_shape else 1
    num_embeddings, embedding_dim = embedding_table.shape
    out_dtype = embedding_table.dtype
    itemsize = out_dtype.itemsize

    # ---- small-input fast path: launch overhead dominates the gather ------
    if n_tokens < min_tokens_for_kernel:
        return jnp.take(embedding_table, speaker_type_ids, axis=0)

    # ---- lane-dense packing ------------------------------------------------
    if embedding_dim < 128 and 128 % embedding_dim == 0:
        pack = 128 // embedding_dim          # pack tokens into one 128-lane row
    else:
        pack = 1
    lane_out = _round_up(pack * embedding_dim, 128)   # always a multiple of 128

    # ---- block-diagonal packed table: row p*V+v holds table[v] in lanes
    #      [p*D:(p+1)*D]; K padded to a multiple of 128 (dense MXU K). -------
    k_total = pack * num_embeddings
    k_pad = _round_up(k_total, 128)
    table_packed = jnp.zeros((k_pad, lane_out), dtype=out_dtype)
    for p in range(pack):
        table_packed = table_packed.at[
            p * num_embeddings:(p + 1) * num_embeddings,
            p * embedding_dim:(p + 1) * embedding_dim,
        ].set(embedding_table)

    # ---- tile sizing (rows = packed output rows) ---------------------------
    sublane = 8 if itemsize >= 4 else (16 if itemsize == 2 else 32)
    rows_needed = _cdiv(n_tokens, pack)
    if tok_tile is None:
        tok_tile = 8192        # HBM-write bound: big steps amortize ~0.35us/step
    rows_tile = max(sublane,
                    _round_up(min(max(1, tok_tile // pack), rows_needed), sublane))

    steps = _cdiv(rows_needed, rows_tile)
    if _num_tensorcores() >= 2:
        # v7x: keep an even, >=2 step count so both TensorCores get work.
        if steps == 1 and rows_needed > sublane:
            steps = 2
        elif steps > 2 and steps % 2 == 1:
            steps += 1
        rows_tile = max(sublane, _round_up(_cdiv(rows_needed, steps), sublane))
        steps = _cdiv(rows_needed, rows_tile)
    # (single-TC v5e/v6e: grid is a serial loop -> keep the largest tile)

    rows_padded = steps * rows_tile
    n_pad = rows_padded * pack

    # ---- ids: flatten, pad with 0 (valid row, sliced off), offset per column -
    ids_flat = speaker_type_ids.reshape(n_tokens).astype(jnp.int32)
    if n_pad != n_tokens:
        ids_flat = jnp.pad(ids_flat, (0, n_pad - n_tokens))
    ids_2d = ids_flat.reshape(rows_padded, pack) + (
        jnp.arange(pack, dtype=jnp.int32) * num_embeddings)[None, :]

    # ---- VMEM budget (actual bytes + headroom; well under v7x's 64 MiB) ----
    ids_tile_bytes = rows_tile * 128 * 4                 # lane-padded int32 tile
    tab_bytes = k_pad * lane_out * itemsize
    out_tile_bytes = rows_tile * lane_out * itemsize
    onehot_bytes = rows_tile * k_pad * max(itemsize, 4)
    vmem_needed = 2 * (ids_tile_bytes + tab_bytes + out_tile_bytes) + onehot_bytes
    vmem_limit = int(min(vmem_needed + (8 << 20), 32 << 20))

    out_packed = pl.pallas_call(
        _speaker_embedding_kernel,
        out_shape=jax.ShapeDtypeStruct((rows_padded, lane_out), out_dtype),
        grid=(steps,),
        in_specs=[
            # ids tile: last dim (pack) equals the full array dim; rows_tile is
            # a multiple of the sublane tile.
            pl.BlockSpec((rows_tile, pack), lambda i: (i, 0)),
            # full packed table, same block every step (stays VMEM resident).
            pl.BlockSpec((k_pad, lane_out), lambda i: (0, 0)),
        ],
        # lane-dense output block: last dim multiple of 128 -> unmasked stores.
        out_specs=pl.BlockSpec((rows_tile, lane_out), lambda i: (i, 0)),
        compiler_params=pltpu.CompilerParams(
            dimension_semantics=("parallel",),
            vmem_limit_bytes=vmem_limit,
        ),
    )(ids_2d, table_packed)

    if lane_out == pack * embedding_dim:
        # (rows, pack*D) row-major bytes == (n_pad, D) row-major bytes.
        out = out_packed.reshape(n_pad, embedding_dim)
    else:
        # pack == 1 with lane padding (D not a divisor/multiple of 128).
        out = out_packed[:, :embedding_dim]
    out = out[:n_tokens].reshape(*id_shape, embedding_dim)
    return out


if __name__ == "__main__":
    # Module config (synthetic, deterministic): nn.Embedding(num_embeddings, embedding_dim)
    num_embeddings = 10   # number of speaker types
    embedding_dim = 32
    batch, seq = 2, 8

    key = jax.random.PRNGKey(0)
    k_table, k_ids, k_ids2 = jax.random.split(key, 3)

    # nn.Embedding default init: weight ~ N(0, 1)
    embedding_table = jax.random.normal(
        k_table, (num_embeddings, embedding_dim), dtype=jnp.float32
    )
    speaker_type_ids = jax.random.randint(
        k_ids, (batch, seq), minval=0, maxval=num_embeddings, dtype=jnp.int32
    )

    # Force the Pallas kernel path (module-sized input is tiny).
    out = bart_learned_speaker_embedding(
        speaker_type_ids, embedding_table, min_tokens_for_kernel=0
    )
    out = jax.block_until_ready(out)
    ref = jnp.take(embedding_table, speaker_type_ids, axis=0)
    assert out.shape == (batch, seq, embedding_dim)
    np.testing.assert_allclose(np.asarray(out), np.asarray(ref), rtol=1e-6, atol=1e-6)

    # Secondary check: multi-row / (on v7x) multi-step grid + token padding.
    ids2 = jax.random.randint(
        k_ids2, (4, 96), minval=0, maxval=num_embeddings, dtype=jnp.int32
    )
    out2 = jax.block_until_ready(
        bart_learned_speaker_embedding(ids2, embedding_table, min_tokens_for_kernel=0)
    )
    ref2 = jnp.take(embedding_table, ids2, axis=0)
    np.testing.assert_allclose(np.asarray(out2), np.asarray(ref2), rtol=1e-6, atol=1e-6)

    # Default small-input fast path (jnp.take) also matches.
    out3 = jax.block_until_ready(
        bart_learned_speaker_embedding(speaker_type_ids, embedding_table)
    )
    np.testing.assert_allclose(np.asarray(out3), np.asarray(ref), rtol=1e-6, atol=1e-6)

    print("KERNEL_OK")
</pallas_src>

<mosaic_0001>
module attributes {stable_mosaic.version = 11 : i64} {
  func.func @_speaker_embedding_kernel(%arg0: i32, %arg1: memref<8x4xi32, #tpu.memory_space<vmem>>, %arg2: memref<128x128xf32, #tpu.memory_space<vmem>>, %arg3: memref<8x128xf32, #tpu.memory_space<vmem>>) attributes {dimension_semantics = [#tpu.dimension_semantics<parallel>], iteration_bounds = array<i64: 1>, scalar_prefetch = 0 : i64, scratch_operands = 0 : i64, tpu.core_type = #tpu.core_type<tc>, window_params = [{transform_indices = @transform_0, window_bounds = array<i64: 8, 4>}, {pipeline_mode = #tpu.pipeline_mode<synchronous>, transform_indices = @transform_1, window_bounds = array<i64: 128, 128>}, {transform_indices = @transform_2, window_bounds = array<i64: 8, 128>}]} {
    %c0 = arith.constant 0 : index
    %c0_0 = arith.constant 0 : index
    %0 = vector.load %arg1[%c0, %c0_0] : memref<8x4xi32, #tpu.memory_space<vmem>>, vector<8x4xi32>
    %c0_1 = arith.constant 0 : index
    %c0_2 = arith.constant 0 : index
    %1 = vector.load %arg2[%c0_1, %c0_2] : memref<128x128xf32, #tpu.memory_space<vmem>>, vector<128x128xf32>
    %2 = tpu.iota {dimensions = array<i32: 1>} : vector<8x128xi32>
    %3 = vector.extract_strided_slice %0 {offsets = [0, 0], sizes = [8, 1], strides = [1, 1]} : vector<8x4xi32> to vector<8x1xi32>
    %4 = vector.broadcast %3 : vector<8x1xi32> to vector<8x128xi32>
    %5 = arith.cmpi eq, %4, %2 : vector<8x128xi32>
    %6 = vector.extract_strided_slice %0 {offsets = [0, 1], sizes = [8, 1], strides = [1, 1]} : vector<8x4xi32> to vector<8x1xi32>
    %7 = vector.broadcast %6 : vector<8x1xi32> to vector<8x128xi32>
    %8 = arith.cmpi eq, %7, %2 : vector<8x128xi32>
    %9 = arith.ori %5, %8 : vector<8x128xi1>
    %10 = vector.extract_strided_slice %0 {offsets = [0, 2], sizes = [8, 1], strides = [1, 1]} : vector<8x4xi32> to vector<8x1xi32>
    %11 = vector.broadcast %10 : vector<8x1xi32> to vector<8x128xi32>
    %12 = arith.cmpi eq, %11, %2 : vector<8x128xi32>
    %13 = arith.ori %9, %12 : vector<8x128xi1>
    %14 = vector.extract_strided_slice %0 {offsets = [0, 3], sizes = [8, 1], strides = [1, 1]} : vector<8x4xi32> to vector<8x1xi32>
    %15 = vector.broadcast %14 : vector<8x1xi32> to vector<8x128xi32>
    %16 = arith.cmpi eq, %15, %2 : vector<8x128xi32>
    %17 = arith.ori %13, %16 : vector<8x128xi1>
    %18 = arith.extui %17 : vector<8x128xi1> to vector<8x128xi32>
    %19 = arith.sitofp %18 : vector<8x128xi32> to vector<8x128xf32>
    %cst = arith.constant dense<0.000000e+00> : vector<8x128xf32>
    %20 = tpu.matmul %19, %1, %cst {dimension_numbers = #tpu.dot_dimension_numbers<[1], [0], [0], [1], [0, 0, 1, 1], [], []>} : vector<8x128xf32>, vector<128x128xf32>, vector<8x128xf32> -> vector<8x128xf32>
    %c0_3 = arith.constant 0 : index
    %c0_4 = arith.constant 0 : index
    %21 = vector.load %arg3[%c0_3, %c0_4] : memref<8x128xf32, #tpu.memory_space<vmem>>, vector<8x128xf32>
    tpu.vector_store %arg3[%c0_3, %c0_4], %20 {strides = array<i32>} : memref<8x128xf32, #tpu.memory_space<vmem>>, vector<8x128xf32>,
    return
  }
  func.func @transform_0(%arg0: i32) -> (i32, i32) {
    %c0_i32 = arith.constant 0 : i32
    %c0_i32_0 = arith.constant 0 : i32
    return %arg0, %c0_i32 : i32, i32
  }
  func.func @transform_1(%arg0: i32) -> (i32, i32) {
    %c0_i32 = arith.constant 0 : i32
    %c0_i32_0 = arith.constant 0 : i32
    %c0_i32_1 = arith.constant 0 : i32
    return %c0_i32, %c0_i32_0 : i32, i32
  }
  func.func @transform_2(%arg0: i32) -> (i32, i32) {
    %c0_i32 = arith.constant 0 : i32
    %c0_i32_0 = arith.constant 0 : i32
    return %arg0, %c0_i32 : i32, i32
  }
}

</mosaic_0001>

<llo_original>
// kernel: tpu_custom_call.1
$region0: #{tpu_custom_call.1}
  #allocation0 [shape = 'u32[]', space=smem, size = 0x4, offset = 0x4, fixed_abs, tag = 'smem constant byte address 0x4 - core index']
  #allocation1 [shape = 'u32[144,128]{1,0:T(1,128)}', space=vmem, size = 0x12000, scoped, tag = 'internal scratch']
  %s0 = inlined_call_operand.vmem [shape: s32[8,4], index: 0, kind: input, shape index: {}]
  %s1 = inlined_call_operand.hbm [shape: f32[128,128], index: 1, kind: input, shape index: {}]
  %s2 = inlined_call_operand.hbm [shape: f32[8,128], index: 2, kind: output, shape index: {}]
  %s3 = sld [smem:[#allocation0]]
  $region22: #{tpu_custom_call.1} parent=0
    _
  %s5 = ssub.s32 1, %s3
  %s6 = scalar_select 0, %s5, %s3
  $region1: #{tpu_custom_call.1} parent=0
    #allocation2 [shape = 'u8[65536]{0}', space=vmem, size = 0x10000, scoped, tag = 'input window, operand 1, single buffered']
    #allocation3 [shape = 's32[1]{0}', space=sflag, size = 0x4, scoped, tag = 'scoped memory for tpu_custom_call.1']
    #allocation4 [shape = 's32[1]{0}', space=sflag, size = 0x4, scoped, tag = 'scoped memory for tpu_custom_call.1']
    #allocation5 [shape = 'u8[4096]{0}', space=vmem, size = 0x1000, scoped, tag = 'output window, operand 0, single buffered']
    %7 = vsyncpa [#allocation3], 0
    %8 = vsyncpa [#allocation4], 0
    // Predicated region
    $region2: #{tpu_custom_call.1} parent=1 // pred_check
      _
    $region3: #{tpu_custom_call.1} parent=1 // pred_check_branch
      %10 = sbr.rel (0) target = $region5
    $region4: #{tpu_custom_call.1} parent=1 // pred_region
      _
    $region5: #{tpu_custom_call.1} parent=1 // pred_fallthru
      _
    // Predicated region
    $region6: #{tpu_custom_call.1} parent=1 // pred_check
      _
    $region7: #{tpu_custom_call.1} parent=1 // pred_check_branch
      %12 = sbr.rel (0) target = $region9
    $region8: #{tpu_custom_call.1} parent=1 // pred_region
      %s14 = ssub.s32 2048, 2048
      %15 = vsyncadd [#allocation3], %s14
      %s16 = sshll.u32 [#allocation2], 4
      %s17 = int_to_ptr.vmem [resolvable:$true] %s16
      %22 = dma.hbm_to_vmem [thread:$0]  %s1, 2048, %s17, [#allocation3], 128, 128, 8
    $region9: #{tpu_custom_call.1} parent=1 // pred_fallthru
      _
    // Predicated region
    $region10: #{tpu_custom_call.1} parent=1 // pred_check
      _
    $region11: #{tpu_custom_call.1} parent=1 // pred_check_branch
      %24 = sbr.rel (0) target = $region13
    $region12: #{tpu_custom_call.1} parent=1 // pred_region
      %25 = dma.done [#allocation3], 2048
    $region13: #{tpu_custom_call.1} parent=1 // pred_fallthru
      _
    %v26 = vld [vmem:[%s0] sm:$0xff]
    %v27 = vld [vmem:[#allocation2] sm:$0xff]
    %v28 = vld [vmem:[#allocation2 + $0x8] sm:$0xff]
    %v29 = vld [vmem:[#allocation2 + $0x10] sm:$0xff]
    %v30 = vld [vmem:[#allocation2 + $0x18] sm:$0xff]
    %v31 = vld [vmem:[#allocation2 + $0x20] sm:$0xff]
    %v32 = vld [vmem:[#allocation2 + $0x28] sm:$0xff]
    %v33 = vld [vmem:[#allocation2 + $0x30] sm:$0xff]
    %v34 = vld [vmem:[#allocation2 + $0x38] sm:$0xff]
    %v35 = vld [vmem:[#allocation2 + $0x40] sm:$0xff]
    %v36 = vld [vmem:[#allocation2 + $0x48] sm:$0xff]
    %v37 = vld [vmem:[#allocation2 + $0x50] sm:$0xff]
    %v38 = vld [vmem:[#allocation2 + $0x58] sm:$0xff]
    %v39 = vld [vmem:[#allocation2 + $0x60] sm:$0xff]
    %v40 = vld [vmem:[#allocation2 + $0x68] sm:$0xff]
    %v41 = vld [vmem:[#allocation2 + $0x70] sm:$0xff]
    %v42 = vld [vmem:[#allocation2 + $0x78] sm:$0xff]
    %v43 = vlaneseq
    %v44 = vand.u32 %v43, 127
    %45 = vset.pattern.permute.xlu0 0
    %46 = vperm.xlu0 %45, %v26
    %v47 = vpop.permute.xlu0 %46
    %vm48 = vcmp.eq.s32.totalorder %v47, %v44
    %49 = vset.pattern.permute.xlu0 1
    %50 = vperm.xlu0 %49, %v26
    %v51 = vpop.permute.xlu0 %50
    %vm52 = vcmp.eq.s32.totalorder %v51, %v44
    %vm53 = vmor %vm48, %vm52
    %54 = vset.pattern.permute.xlu0 2
    %55 = vperm.xlu0 %54, %v26
    %v56 = vpop.permute.xlu0 %55
    %vm57 = vcmp.eq.s32.totalorder %v56, %v44
    %vm58 = vmor %vm53, %vm57
    %59 = vset.pattern.permute.xlu0 3
    %60 = vperm.xlu0 %59, %v26
    %v61 = vpop.permute.xlu0 %60
    %vm62 = vcmp.eq.s32.totalorder %v61, %v44
    %vm63 = vmor %vm58, %vm62
    %v64 = vsel %vm63, 1, 0
    %v65 = vcvt.s32.f32 %v64
    %66 = vmatprep.subr.mxu0 0.0
    %67 = vmatpush1.msra.mxu0 %v42
    %68 = vmatprep.subr.mxu0 0.0
    %69 = vmatpush1.msra.mxu0 %v41
    %70 = vmatprep.subr.mxu0 0.0
    %71 = vmatpush1.msra.mxu0 %v40
    %72 = vmatprep.subr.mxu0 0.0
    %73 = vmatpush1.msra.mxu0 %v39
    %74 = vmatprep.subr.mxu0 0.0
    %75 = vmatpush1.msra.mxu0 %v38
    %76 = vmatprep.subr.mxu0 0.0
    %77 = vmatpush1.msra.mxu0 %v37
    %78 = vmatprep.subr.mxu0 0.0
    %79 = vmatpush1.msra.mxu0 %v36
    %80 = vmatprep.subr.mxu0 0.0
    %81 = vmatpush1.msra.mxu0 %v35
    %82 = vmatprep.subr.mxu0 0.0
    %83 = vmatpush1.msra.mxu0 %v34
    %84 = vmatprep.subr.mxu0 0.0
    %85 = vmatpush1.msra.mxu0 %v33
    %86 = vmatprep.subr.mxu0 0.0
    %87 = vmatpush1.msra.mxu0 %v32
    %88 = vmatprep.subr.mxu0 0.0
    %89 = vmatpush1.msra.mxu0 %v31
    %90 = vmatprep.subr.mxu0 0.0
    %91 = vmatpush1.msra.mxu0 %v30
    %92 = vmatprep.subr.mxu0 0.0
    %93 = vmatpush1.msra.mxu0 %v29
    %94 = vmatprep.subr.mxu0 0.0
    %95 = vmatpush1.msra.mxu0 %v28
    %96 = vmatprep.subr.mxu0 0.0
    %97 = vmatpush1.msra.mxu0 %v27
    %98 = vmatprep.subr.mxu0 0.0
    %99 = vmatpush2.msra.mxu0 0.0
    %100 = vmatprep.subr.mxu0 0.0
    %101 = vmatpush2.msra.mxu0 0.0
    %102 = vmatprep.subr.mxu0 0.0
    %103 = vmatpush2.msra.mxu0 0.0
    %104 = vmatprep.subr.mxu0 0.0
    %105 = vmatpush2.msra.mxu0 0.0
    %106 = vmatprep.subr.mxu0 0.0
    %107 = vmatpush2.msra.mxu0 0.0
    %108 = vmatprep.subr.mxu0 0.0
    %109 = vmatpush2.msra.mxu0 0.0
    %110 = vmatprep.subr.mxu0 0.0
    %111 = vmatpush2.msra.mxu0 0.0
    %112 = vmatprep.subr.mxu0 0.0
    %113 = vmatpush2.msra.mxu0 0.0
    %114 = vmatprep.subr.mxu0 0.0
    %115 = vmatpush2.msra.mxu0 0.0
    %116 = vmatprep.subr.mxu0 0.0
    %117 = vmatpush2.msra.mxu0 0.0
    %118 = vmatprep.subr.mxu0 0.0
    %119 = vmatpush2.msra.mxu0 0.0
    %120 = vmatprep.subr.mxu0 0.0
    %121 = vmatpush2.msra.mxu0 0.0
    %122 = vmatprep.subr.mxu0 0.0
    %123 = vmatpush2.msra.mxu0 0.0
    %124 = vmatprep.subr.mxu0 0.0
    %125 = vmatpush2.msra.mxu0 0.0
    %126 = vmatprep.subr.mxu0 0.0
    %127 = vmatpush2.msra.mxu0 0.0
    %128 = vmatprep.subr.mxu0 0.0
    %129 = vmatpush2.msra.mxu0 0.0
    %130 = vmatprep.mubr.f32.mxu0 0.0
    %131 = vmatmul.mubr.f32.gmra.mxu0 %v65
    %v132 = vpop.f32.mrf.mxu0
    %v133 = vadd.f32 0.0, %v132
    %v134 = vpop.f32.mrf.mxu0
    %135 = vdwg.mxu0
    %136 = vst [vmem:[#allocation5] sm:$0xff] %v133
    // Predicated region
    $region14: #{tpu_custom_call.1} parent=1 // pred_check
      _
    $region15: #{tpu_custom_call.1} parent=1 // pred_check_branch
      %138 = sbr.rel (0) target = $region17
    $region16: #{tpu_custom_call.1} parent=1 // pred_region
      %s140 = ssub.s32 128, 128
      %141 = vsyncadd [#allocation4], %s140
      %s143 = sshll.u32 [#allocation5], 4
      %s144 = int_to_ptr.vmem [resolvable:$true] %s143
      %146 = dma.vmem_to_hbm [thread:$0]  %s144, 128, %s2, [#allocation4]
    $region17: #{tpu_custom_call.1} parent=1 // pred_fallthru
      _
    // Predicated region
    $region18: #{tpu_custom_call.1} parent=1 // pred_check
      _
    $region19: #{tpu_custom_call.1} parent=1 // pred_check_branch
      %148 = sbr.rel (0) target = $region21
    $region20: #{tpu_custom_call.1} parent=1 // pred_region
      %149 = dma.done [#allocation4], 128
    $region21: #{tpu_custom_call.1} parent=1 // pred_fallthru
      _
    %150 = vsyncpa [#allocation3], 1
    %151 = vsyncpa [#allocation4], 1

</llo_original>
